<compile_context>
chip_gen: v7x
topology: tpu7x:2x2x1
jax: 0.10.0
libtpu: 0.0.40
codegen_flags: <defaults>
</compile_context>

<pallas_src>
import functools
import typing as _typing

import jax
import jax.numpy as jnp
from jax.experimental import pallas as pl
from jax.experimental.pallas import tpu as pltpu

_BN_EPS = 1e-5
_LANE = 128
_MIB = 1 << 20
_FUSED_MAX_NODES = 512          # n_pad threshold for the single-kernel-per-layer path


# ----------------------------------------------------------------------------
# small helpers
# ----------------------------------------------------------------------------
def _round_up(x: int, m: int) -> int:
    return -(-x // m) * m


def _pad2d(x: jax.Array, rows: int, cols: int) -> jax.Array:
    return jnp.pad(x, ((0, rows - x.shape[0]), (0, cols - x.shape[1])))


def _vmem_budget_bytes() -> int:
    """Per-generation VMEM budget, chip-aware (v7x has 64 MiB, v5e/v6e 128 MiB)."""
    try:
        cap = int(pltpu.get_tpu_info().vmem_capacity_bytes)
    except Exception:
        cap = 64 * _MIB
    return max(min(cap - 16 * _MIB, 100 * _MIB), 32 * _MIB)


def _choose_agg_tiles(n_pad: int, fout_pad: int, budget: int):
    """Pick (tm, tk, hw_resident) for the aggregation matmul within the VMEM budget.

    Prefers keeping HW fully resident in VMEM (no re-stream per row tile), then the
    largest tiles that fit (bigger tiles amortize the ~0.35us/step grid overhead and
    lengthen contiguous A_hat DMA rows).
    """
    for resident in (True, False):
        for tm in (1024, 512, 256, 128):
            if tm > n_pad or n_pad % tm:
                continue
            for tk in (2048, 1024, 512, 256, 128):
                if tk > n_pad or n_pad % tk:
                    continue
                hw_bytes = (2 * n_pad * fout_pad * 2) if resident else (2 * tk * fout_pad * 2)
                need = (2 * tm * tk * 2              # A_hat double buffer (bf16)
                        + hw_bytes                   # HW (bf16)
                        + 2 * tm * fout_pad * 2      # Z double buffer (bf16)
                        + 2 * 8 * fout_pad * 4       # stats double buffer (f32)
                        + tm * fout_pad * 4)         # f32 accumulator scratch
                if need <= budget:
                    return tm, tk, resident
    return 128, 128, False


# ----------------------------------------------------------------------------
# Kernel bodies
# ----------------------------------------------------------------------------
def _transform_kernel(h_ref, w_ref, hw_ref):
    """HW = H @ W (bf16 x bf16 MXU, f32 accumulate, bf16 out). Layer 0 only."""
    hw_ref[...] = jnp.dot(h_ref[...], w_ref[...],
                          preferred_element_type=jnp.float32).astype(hw_ref.dtype)


def _bn_relu_transform_kernel(z_ref, scale_ref, shift_ref, w_ref, h_ref, hw_ref):
    """Prologue-fused transform for layers > 0:
       h = relu(z*scale + shift)  (previous layer's BN+ReLU, free VPU work)
       emit h (hidden_rep activation) and hw = h @ W."""
    h = jnp.maximum(z_ref[...].astype(jnp.float32) * scale_ref[...] + shift_ref[...], 0.0)
    h_ref[...] = h.astype(h_ref.dtype)
    hw_ref[...] = jnp.dot(h.astype(jnp.bfloat16), w_ref[...],
                          preferred_element_type=jnp.float32).astype(hw_ref.dtype)


def _bn_relu_kernel(z_ref, scale_ref, shift_ref, o_ref):
    """Standalone BN-apply + ReLU (final layer epilogue only)."""
    o_ref[...] = jnp.maximum(z_ref[...].astype(jnp.float32) * scale_ref[...] + shift_ref[...],
                             0.0).astype(o_ref.dtype)


def _aggregate_stats_kernel(a_ref, hw_ref, z_ref, stats_ref, acc_ref, *, tk, hw_resident):
    """Z = A_hat @ HW tiled over (row tiles, k tiles) with f32 accumulator.
    At the last k step, emit Z (bf16) and per-row-tile column sum / sum-of-squares (f32)."""
    k = pl.program_id(1)

    @pl.when(k == 0)
    def _():
        acc_ref[...] = jnp.zeros_like(acc_ref)

    if hw_resident:
        start = pl.multiple_of(k * tk, tk)
        hw_blk = hw_ref[pl.ds(start, tk), :]
    else:
        hw_blk = hw_ref[...]
    acc_ref[...] += jnp.dot(a_ref[...], hw_blk, preferred_element_type=jnp.float32)

    @pl.when(k == pl.num_programs(1) - 1)
    def _():
        z = acc_ref[...]
        z_ref[...] = z.astype(z_ref.dtype)
        col_sum = jnp.sum(z, axis=0, keepdims=True)           # (1, Fout_pad)
        col_sumsq = jnp.sum(z * z, axis=0, keepdims=True)     # (1, Fout_pad)
        row = jax.lax.broadcasted_iota(jnp.int32, stats_ref.shape, 0)
        stats_ref[...] = jnp.where(row == 0, col_sum,
                                   jnp.where(row == 1, col_sumsq, 0.0))


def _fused_layer_kernel(a_ref, h_ref, w_ref, gamma_ref, beta_ref, o_ref, *, inv_n):
    """Small-graph fast path: whole layer (H@W, A@HW, BN stats, BN, ReLU) in one kernel."""
    hw = jnp.dot(h_ref[...], w_ref[...], preferred_element_type=jnp.float32)
    z = jnp.dot(a_ref[...], hw.astype(jnp.bfloat16), preferred_element_type=jnp.float32)
    mean = jnp.sum(z, axis=0, keepdims=True) * inv_n
    var = jnp.maximum(jnp.sum(z * z, axis=0, keepdims=True) * inv_n - mean * mean, 0.0)
    scale = gamma_ref[...] * jax.lax.rsqrt(var + _BN_EPS)
    shift = beta_ref[...] - mean * scale
    o_ref[...] = jnp.maximum(z * scale + shift, 0.0).astype(o_ref.dtype)


# ----------------------------------------------------------------------------
# pallas_call wrappers
# ----------------------------------------------------------------------------
def _transform(h_pad, w_pad, tm, budget):
    n_pad, fin_pad = h_pad.shape
    fout_pad = w_pad.shape[1]
    return pl.pallas_call(
        _transform_kernel,
        out_shape=jax.ShapeDtypeStruct((n_pad, fout_pad), jnp.bfloat16),
        grid=(n_pad // tm,),
        in_specs=[pl.BlockSpec((tm, fin_pad), lambda i: (i, 0)),
                  pl.BlockSpec((fin_pad, fout_pad), lambda i: (0, 0))],
        out_specs=pl.BlockSpec((tm, fout_pad), lambda i: (i, 0)),
        compiler_params=pltpu.CompilerParams(
            dimension_semantics=("parallel",),
            vmem_limit_bytes=budget),
    )(h_pad, w_pad)


def _bn_relu_transform(z_pad, scale, shift, w_pad, tm, budget):
    n_pad, fin_pad = z_pad.shape
    fout_pad = w_pad.shape[1]
    return pl.pallas_call(
        _bn_relu_transform_kernel,
        out_shape=(jax.ShapeDtypeStruct((n_pad, fin_pad), jnp.bfloat16),
                   jax.ShapeDtypeStruct((n_pad, fout_pad), jnp.bfloat16)),
        grid=(n_pad // tm,),
        in_specs=[pl.BlockSpec((tm, fin_pad), lambda i: (i, 0)),
                  pl.BlockSpec((1, fin_pad), lambda i: (0, 0)),
                  pl.BlockSpec((1, fin_pad), lambda i: (0, 0)),
                  pl.BlockSpec((fin_pad, fout_pad), lambda i: (0, 0))],
        out_specs=(pl.BlockSpec((tm, fin_pad), lambda i: (i, 0)),
                   pl.BlockSpec((tm, fout_pad), lambda i: (i, 0))),
        compiler_params=pltpu.CompilerParams(
            dimension_semantics=("parallel",),
            vmem_limit_bytes=budget),
    )(z_pad, scale, shift, w_pad)


def _aggregate(a_pad, hw, tm, tk, hw_resident, budget):
    n_pad = a_pad.shape[0]
    fout_pad = hw.shape[1]
    n_row, n_k = n_pad // tm, n_pad // tk

    if hw_resident:
        hw_spec = pl.BlockSpec((n_pad, fout_pad), lambda i, k: (0, 0))  # fetched once
        hw_read_bytes = n_pad * fout_pad * 2
    else:
        hw_spec = pl.BlockSpec((tk, fout_pad), lambda i, k: (k, 0))
        hw_read_bytes = n_row * n_pad * fout_pad * 2

    cost = pl.CostEstimate(
        flops=2 * n_pad * n_pad * fout_pad,
        transcendentals=0,
        bytes_accessed=(n_pad * n_pad * 2           # A_hat bf16
                        + hw_read_bytes             # HW bf16
                        + n_pad * fout_pad * 2      # Z bf16
                        + n_row * 8 * fout_pad * 4))

    kernel = functools.partial(_aggregate_stats_kernel, tk=tk, hw_resident=hw_resident)
    return pl.pallas_call(
        kernel,
        out_shape=(jax.ShapeDtypeStruct((n_pad, fout_pad), jnp.bfloat16),
                   jax.ShapeDtypeStruct((n_row * 8, fout_pad), jnp.float32)),
        grid=(n_row, n_k),
        in_specs=[pl.BlockSpec((tm, tk), lambda i, k: (i, k)), hw_spec],
        out_specs=(pl.BlockSpec((tm, fout_pad), lambda i, k: (i, 0)),
                   pl.BlockSpec((8, fout_pad), lambda i, k: (i, 0))),
        scratch_shapes=[pltpu.VMEM((tm, fout_pad), jnp.float32)],
        compiler_params=pltpu.CompilerParams(
            dimension_semantics=("parallel", "arbitrary"),
            vmem_limit_bytes=budget),
        cost_estimate=cost,
    )(a_pad, hw)


def _bn_relu(z_pad, scale, shift, tm, budget):
    n_pad, fout_pad = z_pad.shape
    return pl.pallas_call(
        _bn_relu_kernel,
        out_shape=jax.ShapeDtypeStruct((n_pad, fout_pad), jnp.bfloat16),
        grid=(n_pad // tm,),
        in_specs=[pl.BlockSpec((tm, fout_pad), lambda i: (i, 0)),
                  pl.BlockSpec((1, fout_pad), lambda i: (0, 0)),
                  pl.BlockSpec((1, fout_pad), lambda i: (0, 0))],
        out_specs=pl.BlockSpec((tm, fout_pad), lambda i: (i, 0)),
        compiler_params=pltpu.CompilerParams(
            dimension_semantics=("parallel",),
            vmem_limit_bytes=budget),
    )(z_pad, scale, shift)


def _fused_layer(a_pad, h_pad, w_pad, gamma_pad, beta_pad, n_real, budget):
    n_pad = a_pad.shape[0]
    fin_pad = h_pad.shape[1]
    fout_pad = w_pad.shape[1]
    kernel = functools.partial(_fused_layer_kernel, inv_n=1.0 / float(n_real))
    return pl.pallas_call(
        kernel,
        out_shape=jax.ShapeDtypeStruct((n_pad, fout_pad), jnp.bfloat16),
        grid=(1,),
        in_specs=[pl.BlockSpec((n_pad, n_pad), lambda i: (0, 0)),
                  pl.BlockSpec((n_pad, fin_pad), lambda i: (0, 0)),
                  pl.BlockSpec((fin_pad, fout_pad), lambda i: (0, 0)),
                  pl.BlockSpec((1, fout_pad), lambda i: (0, 0)),
                  pl.BlockSpec((1, fout_pad), lambda i: (0, 0))],
        out_specs=pl.BlockSpec((n_pad, fout_pad), lambda i: (0, 0)),
        compiler_params=pltpu.CompilerParams(
            dimension_semantics=("arbitrary",),
            vmem_limit_bytes=budget),
    )(a_pad, h_pad, w_pad, gamma_pad, beta_pad)


def _bn_scale_shift(stats, gamma_pad, beta_pad, n_real):
    """Tiny JAX reduction: per-row-tile partial sums -> fused BN scale/shift."""
    fout_pad = gamma_pad.shape[0]
    s = stats.reshape(-1, 8, fout_pad)
    col_sum = jnp.sum(s[:, 0, :], axis=0)
    col_sumsq = jnp.sum(s[:, 1, :], axis=0)
    inv_n = 1.0 / float(n_real)
    mean = col_sum * inv_n
    var = jnp.maximum(col_sumsq * inv_n - mean * mean, 0.0)     # biased variance
    scale = gamma_pad * jax.lax.rsqrt(var + _BN_EPS)
    # GraphConv bias cancels through training-mode BN: (z+b) - mean(z+b) == z - mean(z).
    shift = beta_pad - mean * scale
    return scale.reshape(1, fout_pad), shift.reshape(1, fout_pad)


# ----------------------------------------------------------------------------
# Graph preprocessing + parameter init (deterministic)
# ----------------------------------------------------------------------------
def build_normalized_adjacency(edges_src: jax.Array, edges_dst: jax.Array,
                               num_nodes: int) -> jax.Array:
    """remove_self_loop -> add_self_loop -> D_in^{-1/2} A^T D_out^{-1/2} (dense),
    so that (A_hat @ H) reproduces DGL GraphConv(norm='both') in-edge aggregation."""
    adj_t = jnp.zeros((num_nodes, num_nodes), jnp.float32)
    adj_t = adj_t.at[edges_dst, edges_src].set(1.0)            # [dst, src]
    eye = jnp.eye(num_nodes, dtype=jnp.float32)
    adj_t = adj_t * (1.0 - eye) + eye                           # remove + add self loops
    deg_in = jnp.sum(adj_t, axis=1)
    deg_out = jnp.sum(adj_t, axis=0)
    return adj_t * jax.lax.rsqrt(deg_in)[:, None] * jax.lax.rsqrt(deg_out)[None, :]


def init_topk_params(key: jax.Array, input_dimension: int,
                     dimensions: _typing.Sequence[int]):
    """GraphConv: xavier-uniform weight, zero bias. BatchNorm1d: gamma=1, beta=0."""
    params = []
    in_dim = input_dimension
    for out_dim in dimensions:
        key, sub = jax.random.split(key)
        limit = jnp.sqrt(6.0 / (in_dim + out_dim))
        w = jax.random.uniform(sub, (in_dim, out_dim), jnp.float32, -limit, limit)
        b = jnp.zeros((out_dim,), jnp.float32)      # cancels through training-mode BN
        gamma = jnp.ones((out_dim,), jnp.float32)
        beta = jnp.zeros((out_dim,), jnp.float32)
        params.append((w, b, gamma, beta))
        in_dim = out_dim
    return params


# ----------------------------------------------------------------------------
# Full _TopK forward
# ----------------------------------------------------------------------------
def topk_forward(a_hat: jax.Array, feat: jax.Array, params) -> _typing.List[jax.Array]:
    n, f0 = feat.shape
    budget = _vmem_budget_bytes()
    hidden_rep: _typing.List[jax.Array] = [feat]

    n_pad_small = _round_up(max(n, 1), _LANE)
    if n_pad_small <= _FUSED_MAX_NODES:
        # --- small-graph fast path: one fused kernel per layer ---
        n_pad = n_pad_small
        a_pad = _pad2d(a_hat, n_pad, n_pad).astype(jnp.bfloat16)
        h_pad = _pad2d(feat, n_pad, _round_up(f0, _LANE)).astype(jnp.bfloat16)
        for (w, b, gamma, beta) in params:
            fin, fout = w.shape
            fin_pad = _round_up(fin, _LANE)
            fout_pad = _round_up(fout, _LANE)
            w_pad = _pad2d(w, fin_pad, fout_pad).astype(jnp.bfloat16)
            gamma_pad = jnp.pad(gamma, (0, fout_pad - fout)).reshape(1, fout_pad)
            beta_pad = jnp.pad(beta, (0, fout_pad - fout)).reshape(1, fout_pad)
            h_pad = _fused_layer(a_pad, h_pad, w_pad, gamma_pad, beta_pad, n, budget)
            hidden_rep.append(h_pad[:n, :fout].astype(jnp.float32))
        return hidden_rep

    # --- tiled path (large graphs) ---
    n_pad = _round_up(max(n, 1), 512)
    a_pad = _pad2d(a_hat, n_pad, n_pad).astype(jnp.bfloat16)
    h_pad = _pad2d(feat, n_pad, _round_up(f0, _LANE)).astype(jnp.bfloat16)

    pending = None   # (z_pad bf16, scale, shift, fout_real) awaiting BN+ReLU
    for (w, b, gamma, beta) in params:
        fin, fout = w.shape
        fin_pad = _round_up(fin, _LANE)
        fout_pad = _round_up(fout, _LANE)
        w_pad = _pad2d(w, fin_pad, fout_pad).astype(jnp.bfloat16)
        gamma_pad = jnp.pad(gamma, (0, fout_pad - fout))
        beta_pad = jnp.pad(beta, (0, fout_pad - fout))

        tm, tk, hw_res = _choose_agg_tiles(n_pad, fout_pad, budget)

        if pending is None:
            hw = _transform(h_pad, w_pad, tm, budget)
        else:
            z_prev, scale_prev, shift_prev, fout_prev = pending
            h_act, hw = _bn_relu_transform(z_prev, scale_prev, shift_prev, w_pad, tm, budget)
            hidden_rep.append(h_act[:n, :fout_prev].astype(jnp.float32))

        z, stats = _aggregate(a_pad, hw, tm, tk, hw_res, budget)
        scale, shift = _bn_scale_shift(stats, gamma_pad, beta_pad, n)
        pending = (z, scale, shift, fout)

    z_last, scale_last, shift_last, fout_last = pending
    h_last = _bn_relu(z_last, scale_last, shift_last, min(n_pad, 512), budget)
    hidden_rep.append(h_last[:n, :fout_last].astype(jnp.float32))
    return hidden_rep


# ----------------------------------------------------------------------------
# Pure-JAX f32 reference (for tolerance check)
# ----------------------------------------------------------------------------
def _reference_forward(a_hat, h, params):
    reps = [h]
    for (w, b, gamma, beta) in params:
        z = a_hat @ h @ w + b
        mean = z.mean(axis=0)
        var = ((z - mean) ** 2).mean(axis=0)
        zn = (z - mean) * jax.lax.rsqrt(var + _BN_EPS)
        h = jax.nn.relu(zn * gamma + beta)
        reps.append(h)
    return reps


# ----------------------------------------------------------------------------
if __name__ == "__main__":
    def _run_case(num_nodes: int, input_dimension: int,
                  dimensions: _typing.Tuple[int, ...], seed: int):
        key = jax.random.PRNGKey(seed)
        key, k_feat = jax.random.split(key)

        # ring graph (bidirectional edges); self loops handled in preprocessing
        src = jnp.arange(num_nodes, dtype=jnp.int32)
        dst = (src + 1) % num_nodes
        edges_src = jnp.concatenate([src, dst])
        edges_dst = jnp.concatenate([dst, src])

        a_hat = build_normalized_adjacency(edges_src, edges_dst, num_nodes)
        feat = jax.random.normal(k_feat, (num_nodes, input_dimension), jnp.float32)
        params = init_topk_params(key, input_dimension, dimensions)

        hidden_rep = topk_forward(a_hat, feat, params)
        for t in hidden_rep:
            jax.block_until_ready(t)

        assert hidden_rep[0].shape == (num_nodes, input_dimension)
        for i, d in enumerate(dimensions):
            assert hidden_rep[i + 1].shape == (num_nodes, d)

        # loose tolerance vs f32 reference (bf16 MXU inputs / bf16 intermediates)
        ref = _reference_forward(a_hat, feat, params)
        for got, want in zip(hidden_rep[1:], ref[1:]):
            err = float(jnp.max(jnp.abs(got - want)))
            assert err < 0.25, f"max abs err vs f32 reference too large: {err} (n={num_nodes})"

    _run_case(8, 16, (32, 16), seed=0)        # small-graph fully-fused path
    _run_case(1100, 16, (32, 16), seed=0)     # tiled aggregation path (grid, resident HW)
    print("KERNEL_OK")
</pallas_src>

<mosaic_0001>
module attributes {stable_mosaic.version = 11 : i64} {
  func.func @_fused_layer_kernel(%arg0: i32, %arg1: memref<128x128xbf16, #tpu.memory_space<vmem>>, %arg2: memref<128x128xbf16, #tpu.memory_space<vmem>>, %arg3: memref<128x128xbf16, #tpu.memory_space<vmem>>, %arg4: memref<1x128xf32, #tpu.memory_space<vmem>>, %arg5: memref<1x128xf32, #tpu.memory_space<vmem>>, %arg6: memref<128x128xbf16, #tpu.memory_space<vmem>>) attributes {dimension_semantics = [#tpu.dimension_semantics<arbitrary>], iteration_bounds = array<i64: 1>, scalar_prefetch = 0 : i64, scratch_operands = 0 : i64, tpu.core_type = #tpu.core_type<tc>, window_params = [{pipeline_mode = #tpu.pipeline_mode<synchronous>, transform_indices = @transform_0, window_bounds = array<i64: 128, 128>}, {pipeline_mode = #tpu.pipeline_mode<synchronous>, transform_indices = @transform_1, window_bounds = array<i64: 128, 128>}, {pipeline_mode = #tpu.pipeline_mode<synchronous>, transform_indices = @transform_2, window_bounds = array<i64: 128, 128>}, {pipeline_mode = #tpu.pipeline_mode<synchronous>, transform_indices = @transform_3, window_bounds = array<i64: 1, 128>}, {pipeline_mode = #tpu.pipeline_mode<synchronous>, transform_indices = @transform_4, window_bounds = array<i64: 1, 128>}, {pipeline_mode = #tpu.pipeline_mode<synchronous>, transform_indices = @transform_5, window_bounds = array<i64: 128, 128>}]} {
    %c0 = arith.constant 0 : index
    %c0_0 = arith.constant 0 : index
    %0 = vector.load %arg2[%c0, %c0_0] : memref<128x128xbf16, #tpu.memory_space<vmem>>, vector<128x128xbf16>
    %c0_1 = arith.constant 0 : index
    %c0_2 = arith.constant 0 : index
    %1 = vector.load %arg3[%c0_1, %c0_2] : memref<128x128xbf16, #tpu.memory_space<vmem>>, vector<128x128xbf16>
    %cst = arith.constant dense<0.000000e+00> : vector<128x128xf32>
    %2 = tpu.matmul %0, %1, %cst {dimension_numbers = #tpu.dot_dimension_numbers<[1], [0], [0], [1], [0, 0, 1, 1], [], []>} : vector<128x128xbf16>, vector<128x128xbf16>, vector<128x128xf32> -> vector<128x128xf32>
    %c0_3 = arith.constant 0 : index
    %c0_4 = arith.constant 0 : index
    %3 = vector.load %arg1[%c0_3, %c0_4] : memref<128x128xbf16, #tpu.memory_space<vmem>>, vector<128x128xbf16>
    %4 = arith.truncf %2 : vector<128x128xf32> to vector<128x128xbf16>
    %cst_5 = arith.constant dense<0.000000e+00> : vector<128x128xf32>
    %5 = tpu.matmul %3, %4, %cst_5 {dimension_numbers = #tpu.dot_dimension_numbers<[1], [0], [0], [1], [0, 0, 1, 1], [], []>} : vector<128x128xbf16>, vector<128x128xbf16>, vector<128x128xf32> -> vector<128x128xf32>
    %cst_6 = arith.constant dense<0.000000e+00> : vector<128xf32>
    %6 = vector.multi_reduction <add>, %5, %cst_6 [0] : vector<128x128xf32> to vector<128xf32>
    %7 = vector.shape_cast %6 : vector<128xf32> to vector<1x128xf32>
    %cst_7 = arith.constant 1.250000e-01 : f32
    %8 = vector.broadcast %cst_7 : f32 to vector<1x128xf32>
    %9 = arith.mulf %7, %8 : vector<1x128xf32>
    %10 = arith.mulf %5, %5 : vector<128x128xf32>
    %cst_8 = arith.constant dense<0.000000e+00> : vector<128xf32>
    %11 = vector.multi_reduction <add>, %10, %cst_8 [0] : vector<128x128xf32> to vector<128xf32>
    %12 = vector.shape_cast %11 : vector<128xf32> to vector<1x128xf32>
    %cst_9 = arith.constant 1.250000e-01 : f32
    %13 = vector.broadcast %cst_9 : f32 to vector<1x128xf32>
    %14 = arith.mulf %12, %13 : vector<1x128xf32>
    %15 = arith.mulf %9, %9 : vector<1x128xf32>
    %16 = arith.subf %14, %15 : vector<1x128xf32>
    %cst_10 = arith.constant 0.000000e+00 : f32
    %17 = vector.broadcast %cst_10 : f32 to vector<1x128xf32>
    %18 = arith.maximumf %16, %17 : vector<1x128xf32>
    %c0_11 = arith.constant 0 : index
    %c0_12 = arith.constant 0 : index
    %19 = vector.load %arg4[%c0_11, %c0_12] : memref<1x128xf32, #tpu.memory_space<vmem>>, vector<1x128xf32>
    %cst_13 = arith.constant 9.99999974E-6 : f32
    %20 = vector.broadcast %cst_13 : f32 to vector<1x128xf32>
    %21 = arith.addf %18, %20 : vector<1x128xf32>
    %22 = math.rsqrt %21 : vector<1x128xf32>
    %23 = arith.mulf %19, %22 : vector<1x128xf32>
    %c0_14 = arith.constant 0 : index
    %c0_15 = arith.constant 0 : index
    %24 = vector.load %arg5[%c0_14, %c0_15] : memref<1x128xf32, #tpu.memory_space<vmem>>, vector<1x128xf32>
    %25 = arith.mulf %9, %23 : vector<1x128xf32>
    %26 = arith.subf %24, %25 : vector<1x128xf32>
    %27 = vector.broadcast %23 : vector<1x128xf32> to vector<128x128xf32>
    %28 = arith.mulf %5, %27 : vector<128x128xf32>
    %29 = vector.broadcast %26 : vector<1x128xf32> to vector<128x128xf32>
    %30 = arith.addf %28, %29 : vector<128x128xf32>
    %cst_16 = arith.constant 0.000000e+00 : f32
    %31 = vector.broadcast %cst_16 : f32 to vector<128x128xf32>
    %32 = arith.maximumf %30, %31 : vector<128x128xf32>
    %33 = arith.truncf %32 : vector<128x128xf32> to vector<128x128xbf16>
    %c0_17 = arith.constant 0 : index
    %c0_18 = arith.constant 0 : index
    %34 = vector.load %arg6[%c0_17, %c0_18] : memref<128x128xbf16, #tpu.memory_space<vmem>>, vector<128x128xbf16>
    tpu.vector_store %arg6[%c0_17, %c0_18], %33 {strides = array<i32>} : memref<128x128xbf16, #tpu.memory_space<vmem>>, vector<128x128xbf16>,
    return
  }
  func.func @transform_0(%arg0: i32) -> (i32, i32) {
    %c0_i32 = arith.constant 0 : i32
    %c0_i32_0 = arith.constant 0 : i32
    %c0_i32_1 = arith.constant 0 : i32
    return %c0_i32, %c0_i32_0 : i32, i32
  }
  func.func @transform_1(%arg0: i32) -> (i32, i32) {
    %c0_i32 = arith.constant 0 : i32
    %c0_i32_0 = arith.constant 0 : i32
    %c0_i32_1 = arith.constant 0 : i32
    return %c0_i32, %c0_i32_0 : i32, i32
  }
  func.func @transform_2(%arg0: i32) -> (i32, i32) {
    %c0_i32 = arith.constant 0 : i32
    %c0_i32_0 = arith.constant 0 : i32
    %c0_i32_1 = arith.constant 0 : i32
    return %c0_i32, %c0_i32_0 : i32, i32
  }
  func.func @transform_3(%arg0: i32) -> (i32, i32) {
    %c0_i32 = arith.constant 0 : i32
    %c0_i32_0 = arith.constant 0 : i32
    %c0_i32_1 = arith.constant 0 : i32
    return %c0_i32, %c0_i32_0 : i32, i32
  }
  func.func @transform_4(%arg0: i32) -> (i32, i32) {
    %c0_i32 = arith.constant 0 : i32
    %c0_i32_0 = arith.constant 0 : i32
    %c0_i32_1 = arith.constant 0 : i32
    return %c0_i32, %c0_i32_0 : i32, i32
  }
  func.func @transform_5(%arg0: i32) -> (i32, i32) {
    %c0_i32 = arith.constant 0 : i32
    %c0_i32_0 = arith.constant 0 : i32
    %c0_i32_1 = arith.constant 0 : i32
    return %c0_i32, %c0_i32_0 : i32, i32
  }
}

</mosaic_0001>

<llo_original>
// kernel: tpu_custom_call.1
$region0: #{tpu_custom_call.1}
  #allocation0 [shape = 'u32[]', space=smem, size = 0x4, offset = 0x4, fixed_abs, tag = 'smem constant byte address 0x4 - core index']
  #allocation1 [shape = 'u32[144,128]{1,0:T(1,128)}', space=vmem, size = 0x12000, scoped, tag = 'internal scratch']
  %s0 = inlined_call_operand.hbm [shape: bf16[128,128], index: 0, kind: input, shape index: {}]
  %s1 = inlined_call_operand.hbm [shape: bf16[128,128], index: 1, kind: input, shape index: {}]
  %s2 = inlined_call_operand.hbm [shape: bf16[128,128], index: 2, kind: input, shape index: {}]
  %s3 = inlined_call_operand.vmem [shape: f32[1,128], index: 3, kind: input, shape index: {}]
  %s4 = inlined_call_operand.vmem [shape: f32[1,128], index: 4, kind: input, shape index: {}]
  %s5 = inlined_call_operand.hbm [shape: bf16[128,128], index: 5, kind: output, shape index: {}]
  %s6 = sld [smem:[#allocation0]]
  $region42: #{tpu_custom_call.1} parent=0
    _
  %s8 = ssub.s32 1, %s6
  %s9 = scalar_select 0, %s8, %s6
  $region1: #{tpu_custom_call.1} parent=0
    #allocation2 [shape = 'u8[32768]{0}', space=vmem, size = 0x8000, scoped, tag = 'input window, operand 0, single buffered']
    #allocation3 [shape = 's32[1]{0}', space=sflag, size = 0x4, scoped, tag = 'scoped memory for tpu_custom_call.1']
    #allocation4 [shape = 's32[1]{0}', space=sflag, size = 0x4, scoped, tag = 'scoped memory for tpu_custom_call.1']
    #allocation5 [shape = 'u8[32768]{0}', space=vmem, size = 0x8000, scoped, tag = 'input window, operand 1, single buffered']
    #allocation6 [shape = 's32[1]{0}', space=sflag, size = 0x4, scoped, tag = 'scoped memory for tpu_custom_call.1']
    #allocation7 [shape = 'u8[32768]{0}', space=vmem, size = 0x8000, scoped, tag = 'input window, operand 2, single buffered']
    #allocation8 [shape = 'u8[32768]{0}', space=vmem, size = 0x8000, scoped, tag = 'output window, operand 0, single buffered']
    %10 = vsyncpa [#allocation3], 0
    %11 = vsyncpa [#allocation6], 0
    %12 = vsyncpa [#allocation4], 0
    // Predicated region
    $region2: #{tpu_custom_call.1} parent=1 // pred_check
      _
    $region3: #{tpu_custom_call.1} parent=1 // pred_check_branch
      %14 = sbr.rel (0) target = $region5
    $region4: #{tpu_custom_call.1} parent=1 // pred_region
      %s16 = ssub.s32 1024, 1024
      %17 = vsyncadd [#allocation3], %s16
      %s18 = sshll.u32 [#allocation2], 4
      %s19 = int_to_ptr.vmem [resolvable:$true] %s18
      %24 = dma.hbm_to_vmem [thread:$0]  %s0, 1024, %s19, [#allocation3], 64, 64, 4
    $region5: #{tpu_custom_call.1} parent=1 // pred_fallthru
      _
    // Predicated region
    $region6: #{tpu_custom_call.1} parent=1 // pred_check
      _
    $region7: #{tpu_custom_call.1} parent=1 // pred_check_branch
      %26 = sbr.rel (0) target = $region9
    $region8: #{tpu_custom_call.1} parent=1 // pred_region
      %s28 = ssub.s32 1024, 1024
      %29 = vsyncadd [#allocation6], %s28
      %s30 = sshll.u32 [#allocation5], 4
      %s31 = int_to_ptr.vmem [resolvable:$true] %s30
      %36 = dma.hbm_to_vmem [thread:$0]  %s1, 1024, %s31, [#allocation6], 64, 64, 4
    $region9: #{tpu_custom_call.1} parent=1 // pred_fallthru
      _
    // Predicated region
    $region10: #{tpu_custom_call.1} parent=1 // pred_check
      _
    $region11: #{tpu_custom_call.1} parent=1 // pred_check_branch
      %38 = sbr.rel (0) target = $region13
    $region12: #{tpu_custom_call.1} parent=1 // pred_region
      %s40 = ssub.s32 1024, 1024
      %41 = vsyncadd [#allocation6], %s40
      %s42 = sshll.u32 [#allocation7], 4
      %s43 = int_to_ptr.vmem [resolvable:$true] %s42
      %48 = dma.hbm_to_vmem [thread:$0]  %s2, 1024, %s43, [#allocation6], 64, 64, 4
    $region13: #{tpu_custom_call.1} parent=1 // pred_fallthru
      _
    // Predicated region
    $region14: #{tpu_custom_call.1} parent=1 // pred_check
      _
    $region15: #{tpu_custom_call.1} parent=1 // pred_check_branch
      %50 = sbr.rel (0) target = $region17
    $region16: #{tpu_custom_call.1} parent=1 // pred_region
      _
    $region17: #{tpu_custom_call.1} parent=1 // pred_fallthru
      _
    // Predicated region
    $region18: #{tpu_custom_call.1} parent=1 // pred_check
      _
    $region19: #{tpu_custom_call.1} parent=1 // pred_check_branch
      %52 = sbr.rel (0) target = $region21
    $region20: #{tpu_custom_call.1} parent=1 // pred_region
      _
    $region21: #{tpu_custom_call.1} parent=1 // pred_fallthru
      _
    // Predicated region
    $region22: #{tpu_custom_call.1} parent=1 // pred_check
      _
    $region23: #{tpu_custom_call.1} parent=1 // pred_check_branch
      %54 = sbr.rel (0) target = $region25
    $region24: #{tpu_custom_call.1} parent=1 // pred_region
      %55 = dma.done [#allocation3], 1024
    $region25: #{tpu_custom_call.1} parent=1 // pred_fallthru
      _
    // Predicated region
    $region26: #{tpu_custom_call.1} parent=1 // pred_check
      _
    $region27: #{tpu_custom_call.1} parent=1 // pred_check_branch
      %57 = sbr.rel (0) target = $region29
    $region28: #{tpu_custom_call.1} parent=1 // pred_region
      %58 = dma.done [#allocation6], 1024
    $region29: #{tpu_custom_call.1} parent=1 // pred_fallthru
      _
    // Predicated region
    $region30: #{tpu_custom_call.1} parent=1 // pred_check
      _
    $region31: #{tpu_custom_call.1} parent=1 // pred_check_branch
      %60 = sbr.rel (0) target = $region33
    $region32: #{tpu_custom_call.1} parent=1 // pred_region
      %61 = dma.done [#allocation6], 1024
    $region33: #{tpu_custom_call.1} parent=1 // pred_fallthru
      _
    %v63 = vld [vmem:[#allocation5] sm:$0xf]
    %v64 = vld [vmem:[#allocation5 + $0x4] sm:$0xf]
    %v65 = vld [vmem:[#allocation5 + $0x8] sm:$0xf]
    %v66 = vld [vmem:[#allocation5 + $0xc] sm:$0xf]
    %v67 = vld [vmem:[#allocation5 + $0x10] sm:$0xf]
    %v68 = vld [vmem:[#allocation5 + $0x14] sm:$0xf]
    %v69 = vld [vmem:[#allocation5 + $0x18] sm:$0xf]
    %v70 = vld [vmem:[#allocation5 + $0x1c] sm:$0xf]
    %v71 = vld [vmem:[#allocation5 + $0x20] sm:$0xf]
    %v72 = vld [vmem:[#allocation5 + $0x24] sm:$0xf]
    %v73 = vld [vmem:[#allocation5 + $0x28] sm:$0xf]
    %v74 = vld [vmem:[#allocation5 + $0x2c] sm:$0xf]
    %v75 = vld [vmem:[#allocation5 + $0x30] sm:$0xf]
    %v76 = vld [vmem:[#allocation5 + $0x34] sm:$0xf]
    %v77 = vld [vmem:[#allocation5 + $0x38] sm:$0xf]
    %v78 = vld [vmem:[#allocation5 + $0x3c] sm:$0xf]
    %v79 = vld [vmem:[#allocation7] sm:$0xf]
    %v80 = vld [vmem:[#allocation7 + $0x4] sm:$0xf]
    %v81 = vld [vmem:[#allocation7 + $0x8] sm:$0xf]
    %v82 = vld [vmem:[#allocation7 + $0xc] sm:$0xf]
    %v83 = vld [vmem:[#allocation7 + $0x10] sm:$0xf]
    %v84 = vld [vmem:[#allocation7 + $0x14] sm:$0xf]
    %v85 = vld [vmem:[#allocation7 + $0x18] sm:$0xf]
    %v86 = vld [vmem:[#allocation7 + $0x1c] sm:$0xf]
    %v87 = vld [vmem:[#allocation7 + $0x20] sm:$0xf]
    %v88 = vld [vmem:[#allocation7 + $0x24] sm:$0xf]
    %v89 = vld [vmem:[#allocation7 + $0x28] sm:$0xf]
    %v90 = vld [vmem:[#allocation7 + $0x2c] sm:$0xf]
    %v91 = vld [vmem:[#allocation7 + $0x30] sm:$0xf]
    %v92 = vld [vmem:[#allocation7 + $0x34] sm:$0xf]
    %v93 = vld [vmem:[#allocation7 + $0x38] sm:$0xf]
    %v94 = vld [vmem:[#allocation7 + $0x3c] sm:$0xf]
    %v111 = vunpack.c.l.b16 %v63
    %v112 = vunpack.c.l.b16 %v64
    %v113 = vunpack.c.l.b16 %v65
    %v114 = vunpack.c.l.b16 %v66
    %v115 = vunpack.c.l.b16 %v67
    %v116 = vunpack.c.l.b16 %v68
    %v117 = vunpack.c.l.b16 %v69
    %v118 = vunpack.c.l.b16 %v70
    %v119 = vunpack.c.l.b16 %v71
    %v120 = vunpack.c.l.b16 %v72
    %v121 = vunpack.c.l.b16 %v73
    %v122 = vunpack.c.l.b16 %v74
    %v123 = vunpack.c.l.b16 %v75
    %v124 = vunpack.c.l.b16 %v76
    %v125 = vunpack.c.l.b16 %v77
    %v126 = vunpack.c.l.b16 %v78
    %v127 = vpack.c.b16 %v112, %v111
    %v128 = vpack.c.b16 %v114, %v113
    %v129 = vpack.c.b16 %v116, %v115
    %v130 = vpack.c.b16 %v118, %v117
    %v131 = vpack.c.b16 %v120, %v119
    %v132 = vpack.c.b16 %v122, %v121
    %v133 = vpack.c.b16 %v124, %v123
    %v134 = vpack.c.b16 %v126, %v125
    %v159 = vunpack.c.l.b16 %v79
    %v160 = vunpack.c.l.b16 %v80
    %v161 = vunpack.c.l.b16 %v81
    %v162 = vunpack.c.l.b16 %v82
    %v163 = vunpack.c.l.b16 %v83
    %v164 = vunpack.c.l.b16 %v84
    %v165 = vunpack.c.l.b16 %v85
    %v166 = vunpack.c.l.b16 %v86
    %v167 = vunpack.c.l.b16 %v87
    %v168 = vunpack.c.l.b16 %v88
    %v169 = vunpack.c.l.b16 %v89
    %v170 = vunpack.c.l.b16 %v90
    %v171 = vunpack.c.l.b16 %v91
    %v172 = vunpack.c.l.b16 %v92
    %v173 = vunpack.c.l.b16 %v93
    %v174 = vunpack.c.l.b16 %v94
    %v175 = vpack.c.b16 %v160, %v159
    %v176 = vpack.c.b16 %v162, %v161
    %v177 = vpack.c.b16 %v164, %v163
    %v178 = vpack.c.b16 %v166, %v165
    %v179 = vpack.c.b16 %v168, %v167
    %v180 = vpack.c.b16 %v170, %v169
    %v181 = vpack.c.b16 %v172, %v171
    %v182 = vpack.c.b16 %v174, %v173
    %191 = vmatprep.subr.bf16.mxu0 0
    %192 = vmatpush1.bf16.msra.mxu0 %v175
    %193 = vmatprep.subr.bf16.mxu0 0
    %194 = vmatpush1.bf16.msra.mxu0 %v176
    %195 = vmatprep.subr.bf16.mxu0 0
    %196 = vmatpush1.bf16.msra.mxu0 %v177
    %197 = vmatprep.subr.bf16.mxu0 0
    %198 = vmatpush1.bf16.msra.mxu0 %v178
    %199 = vmatprep.subr.bf16.mxu0 0
    %200 = vmatpush1.bf16.msra.mxu0 %v179
    %201 = vmatprep.subr.bf16.mxu0 0
    %202 = vmatpush1.bf16.msra.mxu0 %v180
    %203 = vmatprep.subr.bf16.mxu0 0
    %204 = vmatpush1.bf16.msra.mxu0 %v181
    %205 = vmatprep.subr.bf16.mxu0 0
    %206 = vmatpush1.bf16.msra.mxu0 %v182
    %207 = vmatprep.subr.bf16.mxu0 0
    %208 = vmatpush1.bf16.msra.mxu0 0
    %209 = vmatprep.subr.bf16.mxu0 0
    %210 = vmatpush1.bf16.msra.mxu0 0
    %211 = vmatprep.subr.bf16.mxu0 0
    %212 = vmatpush1.bf16.msra.mxu0 0
    %213 = vmatprep.subr.bf16.mxu0 0
    %214 = vmatpush1.bf16.msra.mxu0 0
    %215 = vmatprep.subr.bf16.mxu0 0
    %216 = vmatpush1.bf16.msra.mxu0 0
    %217 = vmatprep.subr.bf16.mxu0 0
    %218 = vmatpush1.bf16.msra.mxu0 0
    %219 = vmatprep.subr.bf16.mxu0 0
    %220 = vmatpush1.bf16.msra.mxu0 0
    %221 = vmatprep.subr.bf16.mxu0 0
    %222 = vmatpush1.bf16.msra.mxu0 0
    %223 = vmatprep.mubr.bf16.mxu0 0
    %224 = vmatmul.mubr.bf16.gmra.mrb[0].mxu0 %v127
    %v225 = vpop.f32.mrb[0].mxu0
    %v226 = vadd.f32 0.0, %v225
    %v227 = vpop.f32.mrb[0].mxu0
    %v228 = vpop.f32.mrb[0].mxu0
    %v229 = vadd.f32 0.0, %v228
    %v230 = vpop.f32.mrb[0].mxu0
    %231 = vmatprep.mubr.bf16.mxu0 0
    %232 = vmatmul.mubr.bf16.gmra.mrb[0].mxu0 %v128
    %v233 = vpop.f32.mrb[0].mxu0
    %v234 = vadd.f32 0.0, %v233
    %v235 = vpop.f32.mrb[0].mxu0
    %v236 = vpop.f32.mrb[0].mxu0
    %v237 = vadd.f32 0.0, %v236
    %v238 = vpop.f32.mrb[0].mxu0
    %239 = vmatprep.mubr.bf16.mxu0 0
    %240 = vmatmul.mubr.bf16.gmra.mrb[0].mxu0 %v129
    %v241 = vpop.f32.mrb[0].mxu0
    %v242 = vadd.f32 0.0, %v241
    %v243 = vpop.f32.mrb[0].mxu0
    %v244 = vpop.f32.mrb[0].mxu0
    %v245 = vadd.f32 0.0, %v244
    %v246 = vpop.f32.mrb[0].mxu0
    %247 = vmatprep.mubr.bf16.mxu0 0
    %248 = vmatmul.mubr.bf16.gmra.mrb[0].mxu0 %v130
    %v249 = vpop.f32.mrb[0].mxu0
    %v250 = vadd.f32 0.0, %v249
    %v251 = vpop.f32.mrb[0].mxu0
    %v252 = vpop.f32.mrb[0].mxu0
    %v253 = vadd.f32 0.0, %v252
    %v254 = vpop.f32.mrb[0].mxu0
    %255 = vmatprep.mubr.bf16.mxu0 0
    %256 = vmatmul.mubr.bf16.gmra.mrb[0].mxu0 %v131
    %v257 = vpop.f32.mrb[0].mxu0
    %v258 = vadd.f32 0.0, %v257
    %v259 = vpop.f32.mrb[0].mxu0
    %v260 = vpop.f32.mrb[0].mxu0
    %v261 = vadd.f32 0.0, %v260
    %v262 = vpop.f32.mrb[0].mxu0
    %263 = vmatprep.mubr.bf16.mxu0 0
    %264 = vmatmul.mubr.bf16.gmra.mrb[0].mxu0 %v132
    %v265 = vpop.f32.mrb[0].mxu0
    %v266 = vadd.f32 0.0, %v265
    %v267 = vpop.f32.mrb[0].mxu0
    %v268 = vpop.f32.mrb[0].mxu0
    %v269 = vadd.f32 0.0, %v268
    %v270 = vpop.f32.mrb[0].mxu0
    %271 = vmatprep.mubr.bf16.mxu0 0
    %272 = vmatmul.mubr.bf16.gmra.mrb[0].mxu0 %v133
    %v273 = vpop.f32.mrb[0].mxu0
    %v274 = vadd.f32 0.0, %v273
    %v275 = vpop.f32.mrb[0].mxu0
    %v276 = vpop.f32.mrb[0].mxu0
    %v277 = vadd.f32 0.0, %v276
    %v278 = vpop.f32.mrb[0].mxu0
    %279 = vmatprep.mubr.bf16.mxu0 0
    %280 = vmatmul.mubr.bf16.gmra.mrb[0].mxu0 %v134
    %v281 = vpop.f32.mrb[0].mxu0
    %v282 = vadd.f32 0.0, %v281
    %v283 = vpop.f32.mrb[0].mxu0
    %v284 = vpop.f32.mrb[0].mxu0
    %v285 = vadd.f32 0.0, %v284
    %v286 = vpop.f32.mrb[0].mxu0
    %287 = vdwg.mxu0
    %v288 = vld [vmem:[#allocation2] sm:$0xf]
    %v289 = vld [vmem:[#allocation2 + $0x4] sm:$0xf]
    %v290 = vld [vmem:[#allocation2 + $0x8] sm:$0xf]
    %v291 = vld [vmem:[#allocation2 + $0xc] sm:$0xf]
    %v292 = vld [vmem:[#allocation2 + $0x10] sm:$0xf]
    %v293 = vld [vmem:[#allocation2 + $0x14] sm:$0xf]
    %v294 = vld [vmem:[#allocation2 + $0x18] sm:$0xf]
    %v295 = vld [vmem:[#allocation2 + $0x1c] sm:$0xf]
    %v296 = vld [vmem:[#allocation2 + $0x20] sm:$0xf]
    %v297 = vld [vmem:[#allocation2 + $0x24] sm:$0xf]
    %v298 = vld [vmem:[#allocation2 + $0x28] sm:$0xf]
    %v299 = vld [vmem:[#allocation2 + $0x2c] sm:$0xf]
    %v300 = vld [vmem:[#allocation2 + $0x30] sm:$0xf]
    %v301 = vld [vmem:[#allocation2 + $0x34] sm:$0xf]
    %v302 = vld [vmem:[#allocation2 + $0x38] sm:$0xf]
    %v303 = vld [vmem:[#allocation2 + $0x3c] sm:$0xf]
    %v304 = vpack.c.bf16 %v229, %v226
    %v305 = vpack.c.bf16 %v237, %v234
    %v306 = vpack.c.bf16 %v245, %v242
    %v307 = vpack.c.bf16 %v253, %v250
    %v308 = vpack.c.bf16 %v261, %v258
    %v309 = vpack.c.bf16 %v269, %v266
    %v310 = vpack.c.bf16 %v277, %v274
    %v311 = vpack.c.bf16 %v285, %v282
    %v328 = vunpack.c.l.b16 %v288
    %v329 = vunpack.c.l.b16 %v289
    %v330 = vunpack.c.l.b16 %v290
    %v331 = vunpack.c.l.b16 %v291
    %v332 = vunpack.c.l.b16 %v292
    %v333 = vunpack.c.l.b16 %v293
    %v334 = vunpack.c.l.b16 %v294
    %v335 = vunpack.c.l.b16 %v295
    %v336 = vunpack.c.l.b16 %v296
    %v337 = vunpack.c.l.b16 %v297
    %v338 = vunpack.c.l.b16 %v298
    %v339 = vunpack.c.l.b16 %v299
    %v340 = vunpack.c.l.b16 %v300
    %v341 = vunpack.c.l.b16 %v301
    %v342 = vunpack.c.l.b16 %v302
    %v343 = vunpack.c.l.b16 %v303
    %v344 = vpack.c.b16 %v329, %v328
    %v345 = vpack.c.b16 %v331, %v330
    %v346 = vpack.c.b16 %v333, %v332
    %v347 = vpack.c.b16 %v335, %v334
    %v348 = vpack.c.b16 %v337, %v336
    %v349 = vpack.c.b16 %v339, %v338
    %v350 = vpack.c.b16 %v341, %v340
    %v351 = vpack.c.b16 %v343, %v342
    %360 = vmatprep.subr.bf16.mxu0 0
    %361 = vmatpush1.bf16.msra.mxu0 %v304
    %362 = vmatprep.subr.bf16.mxu0 0
    %363 = vmatpush1.bf16.msra.mxu0 %v305
    %364 = vmatprep.subr.bf16.mxu0 0
    %365 = vmatpush1.bf16.msra.mxu0 %v306
    %366 = vmatprep.subr.bf16.mxu0 0
    %367 = vmatpush1.bf16.msra.mxu0 %v307
    %368 = vmatprep.subr.bf16.mxu0 0
    %369 = vmatpush1.bf16.msra.mxu0 %v308
    %370 = vmatprep.subr.bf16.mxu0 0
    %371 = vmatpush1.bf16.msra.mxu0 %v309
    %372 = vmatprep.subr.bf16.mxu0 0
    %373 = vmatpush1.bf16.msra.mxu0 %v310
    %374 = vmatprep.subr.bf16.mxu0 0
    %375 = vmatpush1.bf16.msra.mxu0 %v311
    %376 = vmatprep.subr.bf16.mxu0 0
    %377 = vmatpush1.bf16.msra.mxu0 0
    %378 = vmatprep.subr.bf16.mxu0 0
    %379 = vmatpush1.bf16.msra.mxu0 0
    %380 = vmatprep.subr.bf16.mxu0 0
    %381 = vmatpush1.bf16.msra.mxu0 0
    %382 = vmatprep.subr.bf16.mxu0 0
    %383 = vmatpush1.bf16.msra.mxu0 0
    %384 = vmatprep.subr.bf16.mxu0 0
    %385 = vmatpush1.bf16.msra.mxu0 0
    %386 = vmatprep.subr.bf16.mxu0 0
    %387 = vmatpush1.bf16.msra.mxu0 0
    %388 = vmatprep.subr.bf16.mxu0 0
    %389 = vmatpush1.bf16.msra.mxu0 0
    %390 = vmatprep.subr.bf16.mxu0 0
    %391 = vmatpush1.bf16.msra.mxu0 0
    %392 = vmatprep.mubr.bf16.mxu0 0
    %393 = vmatmul.mubr.bf16.gmra.mrb[0].mxu0 %v344
    %v394 = vpop.f32.mrb[0].mxu0
    %v395 = vadd.f32 0.0, %v394
    %v396 = vpop.f32.mrb[0].mxu0
    %v397 = vpop.f32.mrb[0].mxu0
    %v398 = vadd.f32 0.0, %v397
    %v399 = vpop.f32.mrb[0].mxu0
    %400 = vmatprep.mubr.bf16.mxu0 0
    %401 = vmatmul.mubr.bf16.gmra.mrb[0].mxu0 %v345
    %v402 = vpop.f32.mrb[0].mxu0
    %v403 = vadd.f32 0.0, %v402
    %v404 = vpop.f32.mrb[0].mxu0
    %v405 = vpop.f32.mrb[0].mxu0
    %v406 = vadd.f32 0.0, %v405
    %v407 = vpop.f32.mrb[0].mxu0
    %408 = vmatprep.mubr.bf16.mxu0 0
    %409 = vmatmul.mubr.bf16.gmra.mrb[0].mxu0 %v346
    %v410 = vpop.f32.mrb[0].mxu0
    %v411 = vadd.f32 0.0, %v410
    %v412 = vpop.f32.mrb[0].mxu0
    %v413 = vpop.f32.mrb[0].mxu0
    %v414 = vadd.f32 0.0, %v413
    %v415 = vpop.f32.mrb[0].mxu0
    %416 = vmatprep.mubr.bf16.mxu0 0
    %417 = vmatmul.mubr.bf16.gmra.mrb[0].mxu0 %v347
    %v418 = vpop.f32.mrb[0].mxu0
    %v419 = vadd.f32 0.0, %v418
    %v420 = vpop.f32.mrb[0].mxu0
    %v421 = vpop.f32.mrb[0].mxu0
    %v422 = vadd.f32 0.0, %v421
    %v423 = vpop.f32.mrb[0].mxu0
    %424 = vmatprep.mubr.bf16.mxu0 0
    %425 = vmatmul.mubr.bf16.gmra.mrb[0].mxu0 %v348
    %v426 = vpop.f32.mrb[0].mxu0
    %v427 = vadd.f32 0.0, %v426
    %v428 = vpop.f32.mrb[0].mxu0
    %v429 = vpop.f32.mrb[0].mxu0
    %v430 = vadd.f32 0.0, %v429
    %v431 = vpop.f32.mrb[0].mxu0
    %432 = vmatprep.mubr.bf16.mxu0 0
    %433 = vmatmul.mubr.bf16.gmra.mrb[0].mxu0 %v349
    %v434 = vpop.f32.mrb[0].mxu0
    %v435 = vadd.f32 0.0, %v434
    %v436 = vpop.f32.mrb[0].mxu0
    %v437 = vpop.f32.mrb[0].mxu0
    %v438 = vadd.f32 0.0, %v437
    %v439 = vpop.f32.mrb[0].mxu0
    %440 = vmatprep.mubr.bf16.mxu0 0
    %441 = vmatmul.mubr.bf16.gmra.mrb[0].mxu0 %v350
    %v442 = vpop.f32.mrb[0].mxu0
    %v443 = vadd.f32 0.0, %v442
    %v444 = vpop.f32.mrb[0].mxu0
    %v445 = vpop.f32.mrb[0].mxu0
    %v446 = vadd.f32 0.0, %v445
    %v447 = vpop.f32.mrb[0].mxu0
    %448 = vmatprep.mubr.bf16.mxu0 0
    %449 = vmatmul.mubr.bf16.gmra.mrb[0].mxu0 %v351
    %v450 = vpop.f32.mrb[0].mxu0
    %v451 = vadd.f32 0.0, %v450
    %v452 = vpop.f32.mrb[0].mxu0
    %v453 = vpop.f32.mrb[0].mxu0
    %v454 = vadd.f32 0.0, %v453
    %v455 = vpop.f32.mrb[0].mxu0
    %456 = vdwg.mxu0
    %v457 = vadd.f32 %v395, %v398
    %v458 = vadd.f32 %v457, %v403
    %v459 = vadd.f32 %v458, %v406
    %v460 = vadd.f32 %v459, %v411
    %v461 = vadd.f32 %v460, %v414
    %v462 = vadd.f32 %v461, %v419
    %v463 = vadd.f32 %v462, %v422
    %v464 = vadd.f32 %v463, %v427
    %v465 = vadd.f32 %v464, %v430
    %v466 = vadd.f32 %v465, %v435
    %v467 = vadd.f32 %v466, %v438
    %v468 = vadd.f32 %v467, %v443
    %v469 = vadd.f32 %v468, %v446
    %v470 = vadd.f32 %v469, %v451
    %v471 = vadd.f32 %v470, %v454
    %v472 = vrot.slane %v471, 4
    %v473 = vadd.f32 %v471, %v472
    %v474 = vrot.slane %v473, 2
    %v475 = vadd.f32 %v473, %v474
    %v476 = vrot.slane %v475, 1
    %v477 = vadd.f32 %v475, %v476
    %v478 = vmul.f32 %v477, 0.125
    %v479 = vmul.f32 %v395, %v395
    %v480 = vmul.f32 %v398, %v398
    %v481 = vmul.f32 %v403, %v403
    %v482 = vmul.f32 %v406, %v406
    %v483 = vmul.f32 %v411, %v411
    %v484 = vmul.f32 %v414, %v414
    %v485 = vmul.f32 %v419, %v419
    %v486 = vmul.f32 %v422, %v422
    %v487 = vmul.f32 %v427, %v427
    %v488 = vmul.f32 %v430, %v430
    %v489 = vmul.f32 %v435, %v435
    %v490 = vmul.f32 %v438, %v438
    %v491 = vmul.f32 %v443, %v443
    %v492 = vmul.f32 %v446, %v446
    %v493 = vmul.f32 %v451, %v451
    %v494 = vmul.f32 %v454, %v454
    %v495 = vadd.f32 %v479, %v480
    %v496 = vadd.f32 %v495, %v481
    %v497 = vadd.f32 %v496, %v482
    %v498 = vadd.f32 %v497, %v483
    %v499 = vadd.f32 %v498, %v484
    %v500 = vadd.f32 %v499, %v485
    %v501 = vadd.f32 %v500, %v486
    %v502 = vadd.f32 %v501, %v487
    %v503 = vadd.f32 %v502, %v488
    %v504 = vadd.f32 %v503, %v489
    %v505 = vadd.f32 %v504, %v490
    %v506 = vadd.f32 %v505, %v491
    %v507 = vadd.f32 %v506, %v492
    %v508 = vadd.f32 %v507, %v493
    %v509 = vadd.f32 %v508, %v494
    %v510 = vrot.slane %v509, 4
    %v511 = vadd.f32 %v509, %v510
    %v512 = vrot.slane %v511, 2
    %v513 = vadd.f32 %v511, %v512
    %v514 = vrot.slane %v513, 1
    %v515 = vadd.f32 %v513, %v514
    %v516 = vmul.f32 %v515, 0.125
    %v517 = vmul.f32 %v478, %v478
    %v518 = vsub.f32 %v516, %v517
    %v519 = vmax.f32 %v518, 0.0
    %v520 = vld [vmem:[%s3] sm:$0x1]
    %v521 = vadd.f32 %v519, 1e-05
    %v522 = vrsqrt.pop %v521
    %v523 = vmul.f32 %v520, %v522
    %v524 = vld [vmem:[%s4] sm:$0x1]
    %v525 = vmul.f32 %v478, %v523
    %v526 = vsub.f32 %v524, %v525
    %v528 = vlaneseq
    %v529 = vshrl.u32 %v528, 7
    %v530 = vsub.s32 0, %v529
    %v531 = vrot.slane %v523, %v530
    %v533 = vmul.f32 %v395, %v531
    %v534 = vmul.f32 %v398, %v531
    %v535 = vmul.f32 %v403, %v531
    %v536 = vmul.f32 %v406, %v531
    %v537 = vmul.f32 %v411, %v531
    %v538 = vmul.f32 %v414, %v531
    %v539 = vmul.f32 %v419, %v531
    %v540 = vmul.f32 %v422, %v531
    %v541 = vmul.f32 %v427, %v531
    %v542 = vmul.f32 %v430, %v531
    %v543 = vmul.f32 %v435, %v531
    %v544 = vmul.f32 %v438, %v531
    %v545 = vmul.f32 %v443, %v531
    %v546 = vmul.f32 %v446, %v531
    %v547 = vmul.f32 %v451, %v531
    %v548 = vmul.f32 %v454, %v531
    %v550 = vlaneseq
    %v551 = vshrl.u32 %v550, 7
    %v552 = vsub.s32 0, %v551
    %v553 = vrot.slane %v526, %v552
    %v555 = vadd.f32 %v533, %v553
    %v556 = vadd.f32 %v534, %v553
    %v557 = vadd.f32 %v535, %v553
    %v558 = vadd.f32 %v536, %v553
    %v559 = vadd.f32 %v537, %v553
    %v560 = vadd.f32 %v538, %v553
    %v561 = vadd.f32 %v539, %v553
    %v562 = vadd.f32 %v540, %v553
    %v563 = vadd.f32 %v541, %v553
    %v564 = vadd.f32 %v542, %v553
    %v565 = vadd.f32 %v543, %v553
    %v566 = vadd.f32 %v544, %v553
    %v567 = vadd.f32 %v545, %v553
    %v568 = vadd.f32 %v546, %v553
    %v569 = vadd.f32 %v547, %v553
    %v570 = vadd.f32 %v548, %v553
    %v571 = vmax.f32 %v555, 0.0
    %v572 = vmax.f32 %v556, 0.0
    %v573 = vmax.f32 %v557, 0.0
    %v574 = vmax.f32 %v558, 0.0
    %v575 = vmax.f32 %v559, 0.0
    %v576 = vmax.f32 %v560, 0.0
    %v577 = vmax.f32 %v561, 0.0
    %v578 = vmax.f32 %v562, 0.0
    %v579 = vmax.f32 %v563, 0.0
    %v580 = vmax.f32 %v564, 0.0
    %v581 = vmax.f32 %v565, 0.0
    %v582 = vmax.f32 %v566, 0.0
    %v583 = vmax.f32 %v567, 0.0
    %v584 = vmax.f32 %v568, 0.0
    %v585 = vmax.f32 %v569, 0.0
    %v586 = vmax.f32 %v570, 0.0
    %v587 = vpack.c.bf16 %v572, %v571
    %v588 = vpack.c.bf16 %v574, %v573
    %v589 = vpack.c.bf16 %v576, %v575
    %v590 = vpack.c.bf16 %v578, %v577
    %v591 = vpack.c.bf16 %v580, %v579
    %v592 = vpack.c.bf16 %v582, %v581
    %v593 = vpack.c.bf16 %v584, %v583
    %v594 = vpack.c.bf16 %v586, %v585
    %v603 = vunpack.c.l.b16 %v587
    %v604 = vunpack.c.h.b16 %v587
    %v605 = vunpack.c.l.b16 %v588
    %v606 = vunpack.c.h.b16 %v588
    %v607 = vunpack.c.l.b16 %v589
    %v608 = vunpack.c.h.b16 %v589
    %v609 = vunpack.c.l.b16 %v590
    %v610 = vunpack.c.h.b16 %v590
    %v611 = vunpack.c.l.b16 %v591
    %v612 = vunpack.c.h.b16 %v591
    %v613 = vunpack.c.l.b16 %v592
    %v614 = vunpack.c.h.b16 %v592
    %v615 = vunpack.c.l.b16 %v593
    %v616 = vunpack.c.h.b16 %v593
    %v617 = vunpack.c.l.b16 %v594
    %v618 = vunpack.c.h.b16 %v594
    %v619 = vpack.c.b16 %v603, %v603
    %v620 = vpack.c.b16 %v604, %v604
    %v621 = vpack.c.b16 %v605, %v605
    %v622 = vpack.c.b16 %v606, %v606
    %v623 = vpack.c.b16 %v607, %v607
    %v624 = vpack.c.b16 %v608, %v608
    %v625 = vpack.c.b16 %v609, %v609
    %v626 = vpack.c.b16 %v610, %v610
    %v627 = vpack.c.b16 %v611, %v611
    %v628 = vpack.c.b16 %v612, %v612
    %v629 = vpack.c.b16 %v613, %v613
    %v630 = vpack.c.b16 %v614, %v614
    %v631 = vpack.c.b16 %v615, %v615
    %v632 = vpack.c.b16 %v616, %v616
    %v633 = vpack.c.b16 %v617, %v617
    %v634 = vpack.c.b16 %v618, %v618
    %651 = vst [vmem:[#allocation8] sm:$0xf] %v619
    %652 = vst [vmem:[#allocation8 + $0x4] sm:$0xf] %v620
    %653 = vst [vmem:[#allocation8 + $0x8] sm:$0xf] %v621
    %654 = vst [vmem:[#allocation8 + $0xc] sm:$0xf] %v622
    %655 = vst [vmem:[#allocation8 + $0x10] sm:$0xf] %v623
    %656 = vst [vmem:[#allocation8 + $0x14] sm:$0xf] %v624
    %657 = vst [vmem:[#allocation8 + $0x18] sm:$0xf] %v625
    %658 = vst [vmem:[#allocation8 + $0x1c] sm:$0xf] %v626
    %659 = vst [vmem:[#allocation8 + $0x20] sm:$0xf] %v627
    %660 = vst [vmem:[#allocation8 + $0x24] sm:$0xf] %v628
    %661 = vst [vmem:[#allocation8 + $0x28] sm:$0xf] %v629
    %662 = vst [vmem:[#allocation8 + $0x2c] sm:$0xf] %v630
    %663 = vst [vmem:[#allocation8 + $0x30] sm:$0xf] %v631
    %664 = vst [vmem:[#allocation8 + $0x34] sm:$0xf] %v632
    %665 = vst [vmem:[#allocation8 + $0x38] sm:$0xf] %v633
    %666 = vst [vmem:[#allocation8 + $0x3c] sm:$0xf] %v634
    // Predicated region
    $region34: #{tpu_custom_call.1} parent=1 // pred_check
      _
    $region35: #{tpu_custom_call.1} parent=1 // pred_check_branch
      %668 = sbr.rel (0) target = $region37
    $region36: #{tpu_custom_call.1} parent=1 // pred_region
      %s670 = ssub.s32 1024, 1024
      %671 = vsyncadd [#allocation4], %s670
      %s672 = sshll.u32 [#allocation8], 4
      %s673 = int_to_ptr.vmem [resolvable:$true] %s672
      %678 = dma.vmem_to_hbm [thread:$0]  %s673, 1024, %s5, [#allocation4], 64, 64, 4
    $region37: #{tpu_custom_call.1} parent=1 // pred_fallthru
      _
    // Predicated region
    $region38: #{tpu_custom_call.1} parent=1 // pred_check
      _
    $region39: #{tpu_custom_call.1} parent=1 // pred_check_branch
      %680 = sbr.rel (0) target = $region41
    $region40: #{tpu_custom_call.1} parent=1 // pred_region
      %681 = dma.done [#allocation4], 1024
    $region41: #{tpu_custom_call.1} parent=1 // pred_fallthru
      _
    %682 = vsyncpa [#allocation3], 1
    %683 = vsyncpa [#allocation6], 1
    %684 = vsyncpa [#allocation4], 1

</llo_original>
